<compile_context>
chip_gen: v7x
topology: tpu7x:2x2x1
jax: 0.10.0
libtpu: 0.0.40
codegen_flags: <defaults>
</compile_context>

<pallas_src>
import jax
import jax.numpy as jnp
import numpy as np
from jax.experimental import pallas as pl
from jax.experimental.pallas import tpu as pltpu


def _round_up(x, m):
    return (x + m - 1) // m * m


def textcnn_kernel(slab_ref, w_ref, b_ref, valid_ref, lin_w_ref, lin_b_ref,
                   out_ref):
    """One grid step handles TB batch rows.

    slab_ref  : (TB*Lw, k_max*H)  bf16  im2col window slab (lane-dense LHS)
    w_ref     : (k_max*H, C_pad)  bf16  merged conv bank (embedding halves
                                        pre-summed, taps >= k_i zeroed,
                                        channels zero-padded to 128 lanes)
    b_ref     : (1, C_pad)        f32   merged conv bias
    valid_ref : (1, C_pad)        i32   # of valid conv positions per channel
    lin_w_ref : (C_pad, O_pad)    f32   zero-padded output Linear weight
    lin_b_ref : (1, O_pad)        f32   zero-padded output Linear bias
    out_ref   : (TB, O_pad)       f32   logits (lane-dense store)
    """
    m, _ = slab_ref.shape
    c_pad = w_ref.shape[1]
    tb = out_ref.shape[0]
    lw = m // tb

    # Single K=k_max*H MXU dot (batch and positions folded into the M dim).
    acc = jnp.dot(slab_ref[...], w_ref[...],
                  preferred_element_type=jnp.float32)        # (TB*Lw, C_pad)
    acc = acc.reshape(tb, lw, c_pad)

    # Mask positions that are out of range for each filter width, then pool.
    t_ids = jax.lax.broadcasted_iota(jnp.int32, (lw, c_pad), 0)
    acc = jnp.where(t_ids < valid_ref[...], acc, -jnp.inf)
    pooled = jnp.max(acc, axis=1)                             # (TB, C_pad)

    # Conv bias + ReLU after the pool (commute with a per-channel constant),
    # then the fused output Linear (tiny f32 dot, padded lanes are zero).
    feats = jnp.maximum(pooled + b_ref[...], 0.0)             # (TB, C_pad)
    out_ref[...] = (jnp.dot(feats, lin_w_ref[...],
                            preferred_element_type=jnp.float32)
                    + lin_b_ref[...])


def textcnn_forward(x_tokens, emb_matrix, conv_ws, conv_bs, lin_w, lin_b,
                    kernel_sizes, num_channels, output_size, *, batch_tile=64):
    """conv_ws[i]: torch layout (C_i, 2H, k_i); conv_bs[i]: (C_i,);
       lin_w: torch layout (O, sum(C)); lin_b: (O,)."""
    B, L = x_tokens.shape
    V, H = emb_matrix.shape
    k_max = max(kernel_sizes)
    assert L >= k_max, "sequence shorter than the widest conv kernel"
    c_total = sum(num_channels)
    c_pad = _round_up(c_total, 128)            # lane-dense conv-bank width
    o_pad = _round_up(output_size, 128)        # lane-dense output width
    kh = k_max * H                             # im2col contraction depth

    # ---- merged, half-folded, flattened conv weight bank (host side) -------
    # Both embedding tables hold the same word2vec matrix (per __init__), so
    # emb = [e, e] and the two input-channel halves of each Conv1d fold into one.
    w_flat = np.zeros((kh, c_pad), np.float32)
    b_bank = np.zeros((1, c_pad), np.float32)
    valid = np.ones((1, c_pad), np.int32)      # padded lanes: w=0, b=0, valid=1
    off = 0
    for w, bias, k, c in zip(conv_ws, conv_bs, kernel_sizes, num_channels):
        w = np.asarray(w, np.float32)                         # (C, 2H, k)
        w_eff = w[:, :H, :] + w[:, H:, :]                     # (C, H, k)
        for j in range(k):
            w_flat[j * H:(j + 1) * H, off:off + c] = w_eff[:, :, j].T
        b_bank[0, off:off + c] = np.asarray(bias, np.float32)
        valid[0, off:off + c] = L - k + 1
        off += c

    # ---- zero-padded output Linear (fused into the kernel epilogue) --------
    lw_pad = np.zeros((c_pad, o_pad), np.float32)
    lb_pad = np.zeros((1, o_pad), np.float32)
    lw_pad[:c_total, :output_size] = np.asarray(lin_w, np.float32).T
    lb_pad[0, :output_size] = np.asarray(lin_b, np.float32)

    # ---- tiling ------------------------------------------------------------
    lw = _round_up(L, 8)                       # conv positions computed per row
    l_need = lw + k_max - 1                    # sequence length to gather
    # Keep at least 2 batch tiles when B > 8 so v7x's 2 TCs both get work.
    tb = _round_up(max(1, min(batch_tile, -(-B // 2))), 8)
    b_pad = _round_up(B, tb)
    n_tiles = b_pad // tb
    # Per-step slab block is tb*lw*kh*2 bytes (double-buffered); tiny at the
    # recommended TB sweep range (32-256).  Raise vmem_limit_bytes if TB>=512.

    # ---- embedding gather straight to bf16, padding folded into the gather -
    table = jnp.concatenate(
        [jnp.asarray(emb_matrix, jnp.bfloat16),
         jnp.zeros((1, H), jnp.bfloat16)], axis=0)            # row V == zeros
    tok = jnp.full((b_pad, l_need), V, jnp.int32)
    tok = tok.at[:B, :L].set(x_tokens.astype(jnp.int32))
    e = jnp.take(table, tok, axis=0)                          # (b_pad, l_need, H)

    # ---- im2col slab: lane-dense 2D MXU LHS --------------------------------
    slab = jnp.concatenate([e[:, j:j + lw, :] for j in range(k_max)], axis=-1)
    slab = slab.reshape(b_pad * lw, kh)                       # (b_pad*Lw, k_max*H)

    out = pl.pallas_call(
        textcnn_kernel,
        out_shape=jax.ShapeDtypeStruct((b_pad, o_pad), jnp.float32),
        grid=(n_tiles,),
        in_specs=[
            pl.BlockSpec((tb * lw, kh), lambda b: (b, 0)),
            pl.BlockSpec((kh, c_pad), lambda b: (0, 0)),
            pl.BlockSpec((1, c_pad), lambda b: (0, 0)),
            pl.BlockSpec((1, c_pad), lambda b: (0, 0)),
            pl.BlockSpec((c_pad, o_pad), lambda b: (0, 0)),
            pl.BlockSpec((1, o_pad), lambda b: (0, 0)),
        ],
        out_specs=pl.BlockSpec((tb, o_pad), lambda b: (b, 0)),
        compiler_params=pltpu.CompilerParams(
            dimension_semantics=("parallel",)),
    )(slab,
      jnp.asarray(w_flat, jnp.bfloat16),
      jnp.asarray(b_bank),
      jnp.asarray(valid),
      jnp.asarray(lw_pad),
      jnp.asarray(lb_pad))

    # TODO(synk): Dropout(p=0.5) is identity in eval mode; training-mode
    # stochastic dropout is not implemented.
    return out[:B, :output_size]                              # (B, O)


def ref_forward(x_tokens, emb_matrix, conv_ws, conv_bs, lin_w, lin_b,
                kernel_sizes):
    """Pure-JAX f32 reference mirroring the PyTorch forward (eval mode)."""
    e = jnp.take(emb_matrix, x_tokens, axis=0)
    emb = jnp.concatenate([e, e], axis=-1)                     # (B, L, 2H)
    L = emb.shape[1]
    feats = []
    for w, b, k in zip(conv_ws, conv_bs, kernel_sizes):
        lo = L - k + 1
        acc = jnp.zeros((emb.shape[0], lo, w.shape[0]), jnp.float32)
        for j in range(k):
            acc = acc + jnp.einsum('bld,cd->blc', emb[:, j:j + lo, :], w[:, :, j])
        acc = jax.nn.relu(acc + b)
        feats.append(jnp.max(acc, axis=1))
    feat = jnp.concatenate(feats, axis=1)
    return feat @ lin_w.T + lin_b


if __name__ == "__main__":
    # Small synthetic configuration consistent with the module's forward.
    vocab_size = 50          # input_size  (num_embeddings)
    hidden_size = 32         # H; conv in_channels = 2H = 64
    seq_len = 16             # L
    batch = 16               # B (>= 2 batch tiles so both v7x TCs get work)
    output_size = 2
    kernel_sizes = (3, 4, 5)
    num_channels = (8, 8, 8)

    key = jax.random.PRNGKey(0)
    keys = jax.random.split(key, 12)

    emb_matrix = 0.1 * jax.random.normal(keys[0], (vocab_size, hidden_size),
                                         jnp.float32)
    x_tokens = jax.random.randint(keys[1], (batch, seq_len), 0, vocab_size)
    # batch_seq_len is unused by the PyTorch forward; kept for signature parity.
    batch_seq_len = jnp.full((batch,), seq_len, jnp.int32)

    conv_ws, conv_bs = [], []
    for i, (c, k) in enumerate(zip(num_channels, kernel_sizes)):
        conv_ws.append(0.1 * jax.random.normal(
            keys[2 + i], (c, 2 * hidden_size, k), jnp.float32))   # torch layout
        conv_bs.append(0.1 * jax.random.normal(keys[5 + i], (c,), jnp.float32))

    lin_w = 0.1 * jax.random.normal(keys[8], (output_size, sum(num_channels)),
                                    jnp.float32)                  # torch layout
    lin_b = 0.1 * jax.random.normal(keys[9], (output_size,), jnp.float32)

    out = textcnn_forward(x_tokens, emb_matrix, conv_ws, conv_bs, lin_w, lin_b,
                          kernel_sizes, num_channels, output_size)
    out = jax.block_until_ready(out)

    ref = ref_forward(x_tokens, emb_matrix, conv_ws, conv_bs, lin_w, lin_b,
                      kernel_sizes)
    assert out.shape == (batch, output_size)
    # bf16 transport of embeddings / conv weights (f32 accumulation) -> loose tol.
    assert jnp.allclose(out, ref, atol=2e-2, rtol=2e-2), (out, ref)

    print("KERNEL_OK")
</pallas_src>

<mosaic_0001>
module attributes {stable_mosaic.version = 11 : i64} {
  func.func @textcnn_kernel(%arg0: i32, %arg1: memref<128x160xbf16, #tpu.memory_space<vmem>>, %arg2: memref<160x128xbf16, #tpu.memory_space<vmem>>, %arg3: memref<1x128xf32, #tpu.memory_space<vmem>>, %arg4: memref<1x128xi32, #tpu.memory_space<vmem>>, %arg5: memref<128x128xf32, #tpu.memory_space<vmem>>, %arg6: memref<1x128xf32, #tpu.memory_space<vmem>>, %arg7: memref<8x128xf32, #tpu.memory_space<vmem>>) attributes {dimension_semantics = [#tpu.dimension_semantics<parallel>], iteration_bounds = array<i64: 2>, scalar_prefetch = 0 : i64, scratch_operands = 0 : i64, tpu.core_type = #tpu.core_type<tc>, window_params = [{transform_indices = @transform_0, window_bounds = array<i64: 128, 160>}, {pipeline_mode = #tpu.pipeline_mode<synchronous>, transform_indices = @transform_1, window_bounds = array<i64: 160, 128>}, {pipeline_mode = #tpu.pipeline_mode<synchronous>, transform_indices = @transform_2, window_bounds = array<i64: 1, 128>}, {pipeline_mode = #tpu.pipeline_mode<synchronous>, transform_indices = @transform_3, window_bounds = array<i64: 1, 128>}, {pipeline_mode = #tpu.pipeline_mode<synchronous>, transform_indices = @transform_4, window_bounds = array<i64: 128, 128>}, {pipeline_mode = #tpu.pipeline_mode<synchronous>, transform_indices = @transform_5, window_bounds = array<i64: 1, 128>}, {transform_indices = @transform_6, window_bounds = array<i64: 8, 128>}]} {
    %c0 = arith.constant 0 : index
    %c0_0 = arith.constant 0 : index
    %0 = vector.load %arg1[%c0, %c0_0] : memref<128x160xbf16, #tpu.memory_space<vmem>>, vector<128x160xbf16>
    %c0_1 = arith.constant 0 : index
    %c0_2 = arith.constant 0 : index
    %1 = vector.load %arg2[%c0_1, %c0_2] : memref<160x128xbf16, #tpu.memory_space<vmem>>, vector<160x128xbf16>
    %cst = arith.constant dense<0.000000e+00> : vector<128x128xf32>
    %2 = tpu.matmul %0, %1, %cst {dimension_numbers = #tpu.dot_dimension_numbers<[1], [0], [0], [1], [0, 0, 1, 1], [], []>} : vector<128x160xbf16>, vector<160x128xbf16>, vector<128x128xf32> -> vector<128x128xf32>
    %3 = vector.shape_cast %2 : vector<128x128xf32> to vector<8x16x128xf32>
    %4 = tpu.iota {dimensions = array<i32: 0>} : vector<16x128xi32>
    %c0_3 = arith.constant 0 : index
    %c0_4 = arith.constant 0 : index
    %5 = vector.load %arg4[%c0_3, %c0_4] : memref<1x128xi32, #tpu.memory_space<vmem>>, vector<1x128xi32>
    %6 = vector.broadcast %5 : vector<1x128xi32> to vector<16x128xi32>
    %7 = arith.cmpi slt, %4, %6 : vector<16x128xi32>
    %cst_5 = arith.constant 0xFF800000 : f32
    %8 = vector.shape_cast %7 : vector<16x128xi1> to vector<1x16x128xi1>
    %9 = vector.broadcast %8 : vector<1x16x128xi1> to vector<8x16x128xi1>
    %10 = vector.broadcast %cst_5 : f32 to vector<8x16x128xf32>
    %11 = arith.select %9, %3, %10 : vector<8x16x128xi1>, vector<8x16x128xf32>
    %cst_6 = arith.constant dense<0xFF800000> : vector<8x128xf32>
    %12 = vector.multi_reduction <maximumf>, %11, %cst_6 [1] : vector<8x16x128xf32> to vector<8x128xf32>
    %c0_7 = arith.constant 0 : index
    %c0_8 = arith.constant 0 : index
    %13 = vector.load %arg3[%c0_7, %c0_8] : memref<1x128xf32, #tpu.memory_space<vmem>>, vector<1x128xf32>
    %14 = vector.broadcast %13 : vector<1x128xf32> to vector<8x128xf32>
    %15 = arith.addf %12, %14 : vector<8x128xf32>
    %cst_9 = arith.constant 0.000000e+00 : f32
    %16 = vector.broadcast %cst_9 : f32 to vector<8x128xf32>
    %17 = arith.maximumf %15, %16 : vector<8x128xf32>
    %c0_10 = arith.constant 0 : index
    %c0_11 = arith.constant 0 : index
    %18 = vector.load %arg5[%c0_10, %c0_11] : memref<128x128xf32, #tpu.memory_space<vmem>>, vector<128x128xf32>
    %cst_12 = arith.constant dense<0.000000e+00> : vector<8x128xf32>
    %19 = tpu.matmul %17, %18, %cst_12 {dimension_numbers = #tpu.dot_dimension_numbers<[1], [0], [0], [1], [0, 0, 1, 1], [], []>} : vector<8x128xf32>, vector<128x128xf32>, vector<8x128xf32> -> vector<8x128xf32>
    %c0_13 = arith.constant 0 : index
    %c0_14 = arith.constant 0 : index
    %20 = vector.load %arg6[%c0_13, %c0_14] : memref<1x128xf32, #tpu.memory_space<vmem>>, vector<1x128xf32>
    %21 = vector.broadcast %20 : vector<1x128xf32> to vector<8x128xf32>
    %22 = arith.addf %19, %21 : vector<8x128xf32>
    %c0_15 = arith.constant 0 : index
    %c0_16 = arith.constant 0 : index
    %23 = vector.load %arg7[%c0_15, %c0_16] : memref<8x128xf32, #tpu.memory_space<vmem>>, vector<8x128xf32>
    tpu.vector_store %arg7[%c0_15, %c0_16], %22 {strides = array<i32>} : memref<8x128xf32, #tpu.memory_space<vmem>>, vector<8x128xf32>,
    return
  }
  func.func @transform_0(%arg0: i32) -> (i32, i32) {
    %c0_i32 = arith.constant 0 : i32
    %c0_i32_0 = arith.constant 0 : i32
    return %arg0, %c0_i32 : i32, i32
  }
  func.func @transform_1(%arg0: i32) -> (i32, i32) {
    %c0_i32 = arith.constant 0 : i32
    %c0_i32_0 = arith.constant 0 : i32
    %c0_i32_1 = arith.constant 0 : i32
    return %c0_i32, %c0_i32_0 : i32, i32
  }
  func.func @transform_2(%arg0: i32) -> (i32, i32) {
    %c0_i32 = arith.constant 0 : i32
    %c0_i32_0 = arith.constant 0 : i32
    %c0_i32_1 = arith.constant 0 : i32
    return %c0_i32, %c0_i32_0 : i32, i32
  }
  func.func @transform_3(%arg0: i32) -> (i32, i32) {
    %c0_i32 = arith.constant 0 : i32
    %c0_i32_0 = arith.constant 0 : i32
    %c0_i32_1 = arith.constant 0 : i32
    return %c0_i32, %c0_i32_0 : i32, i32
  }
  func.func @transform_4(%arg0: i32) -> (i32, i32) {
    %c0_i32 = arith.constant 0 : i32
    %c0_i32_0 = arith.constant 0 : i32
    %c0_i32_1 = arith.constant 0 : i32
    return %c0_i32, %c0_i32_0 : i32, i32
  }
  func.func @transform_5(%arg0: i32) -> (i32, i32) {
    %c0_i32 = arith.constant 0 : i32
    %c0_i32_0 = arith.constant 0 : i32
    %c0_i32_1 = arith.constant 0 : i32
    return %c0_i32, %c0_i32_0 : i32, i32
  }
  func.func @transform_6(%arg0: i32) -> (i32, i32) {
    %c0_i32 = arith.constant 0 : i32
    %c0_i32_0 = arith.constant 0 : i32
    return %arg0, %c0_i32 : i32, i32
  }
}

</mosaic_0001>

<llo_original>
// kernel: tpu_custom_call.1
$region0: #{tpu_custom_call.1}
  #allocation0 [shape = 'u32[]', space=smem, size = 0x4, offset = 0x4, fixed_abs, tag = 'smem constant byte address 0x4 - core index']
  #allocation1 [shape = 'u32[144,128]{1,0:T(1,128)}', space=vmem, size = 0x12000, scoped, tag = 'internal scratch']
  %s0 = inlined_call_operand.vmem [shape: bf16[256,160], index: 0, kind: input, shape index: {}]
  %s1 = inlined_call_operand.vmem [shape: bf16[160,128], index: 1, kind: input, shape index: {}]
  %s2 = inlined_call_operand.vmem [shape: f32[1,128], index: 2, kind: input, shape index: {}]
  %s3 = inlined_call_operand.vmem [shape: s32[1,128], index: 3, kind: input, shape index: {}]
  %s4 = inlined_call_operand.vmem [shape: f32[128,128], index: 4, kind: input, shape index: {}]
  %s5 = inlined_call_operand.vmem [shape: f32[1,128], index: 5, kind: input, shape index: {}]
  %s6 = inlined_call_operand.hbm [shape: f32[16,128], index: 6, kind: output, shape index: {}]
  %s7 = sld [smem:[#allocation0]]
  $region57: #{tpu_custom_call.1} parent=0
    _
  %s9 = ssub.s32 1, %s7
  %s10 = scalar_select 0, %s9, %s7
  $region1: #{tpu_custom_call.1} parent=0
    #allocation2 [shape = 'u8[8192]{0}', space=vmem, size = 0x2000, scoped, tag = 'output window, operand 0']
    #allocation3 [shape = 's32[2]{0}', space=sflag, size = 0x8, scoped, tag = 'scoped memory for tpu_custom_call.1']
    %11 = vsyncpa [#allocation3], 0
    %s12 = scalar_lea.sflag [#allocation3], 1
    %13 = vsyncpa %s12, 0
    loop: start=0, step=1, limit=4
    $region2: #{tpu_custom_call.1} parent=1 // loop_pre_header
      _
    $region3: #{tpu_custom_call.1} parent=1 // loop_header
      %s15 = sphi 0, %s19
      %p16 = scmp.ge.s32.totalorder %s15, 4
      %s25 = sphi 0, %s27
      %s28 = sphi 0, %s25
      %s29 = sphi 0, %s28
      %s45 = sphi 0, %s29
      %s49 = sphi 0, %s49
      %s51 = sphi 0, %s49
      %s52 = sphi 0, %s51
      %s66 = sphi 0, %s52
      %s70 = sphi 0, %s70
      %s72 = sphi 0, %s70
      %s73 = sphi 0, %s72
      %s87 = sphi 0, %s73
      %s91 = sphi 0, %s91
      %s93 = sphi 0, %s91
      %s94 = sphi 0, %s93
      %s108 = sphi 0, %s94
      %s112 = sphi 0, %s112
      %s114 = sphi 0, %s112
      %s115 = sphi 0, %s114
      %s129 = sphi 0, %s115
      %s133 = sphi 0, %s133
      %s135 = sphi 0, %s133
      %s136 = sphi 0, %s135
      %s150 = sphi 0, %s136
      %s156 = sphi 0, %s158
      %s159 = sphi 0, %s156
      %s160 = sphi 0, %s159
      %s176 = sphi 0, %s160
    $region4: #{tpu_custom_call.1} parent=1 // loop_header_branch
      %18 = sbr.rel (%p16) target = $region8
    $region5: #{tpu_custom_call.1} parent=1 // loop_body
      %s20 = ssub.s32 %s15, 1
      %s21 = ssub.s32 %s15, 2
      %s22 = sadd.s32 %s15, 1
      %s23 = ssub.s32 %s15, %s22
      %p24 = scmp.eq.s32.totalorder %s23, 0
      %s26 = sadd.s32 %s25, 1
      %s27 = scalar_select %p24, %s25, %s26
      %p30 = pneg %p24
      %p31 = scmp.eq.s32.totalorder %s15, 1
      %p32 = por %p30, %p31
      %p33 = scmp.ne.s32.totalorder %s25, %s28
      %p34 = scmp.eq.s32.totalorder %s15, 0
      %p35 = por %p33, %p34
      %p36 = scmp.ne.s32.totalorder %s25, %s28
      %p37 = scmp.eq.s32.totalorder %s20, 1
      %p38 = por %p36, %p37
      %p39 = scmp.ne.s32.totalorder %s28, %s29
      %p40 = scmp.eq.s32.totalorder %s20, 0
      %p41 = por %p39, %p40
      %p42 = scmp.ne.s32.totalorder %s28, %s29
      %p43 = scmp.eq.s32.totalorder %s21, 1
      %p44 = por %p42, %p43
      %p46 = scmp.ne.s32.totalorder %s29, %s45
      %p47 = scmp.eq.s32.totalorder %s21, 0
      %p48 = por %p46, %p47
      %s50 = sadd.s32 %s49, 1
      %p53 = scmp.eq.s32.totalorder %s15, 1
      %p54 = scmp.ne.s32.totalorder %s49, %s51
      %p55 = scmp.eq.s32.totalorder %s15, 0
      %p56 = por %p54, %p55
      %p57 = scmp.ne.s32.totalorder %s49, %s51
      %p58 = scmp.eq.s32.totalorder %s20, 1
      %p59 = por %p57, %p58
      %p60 = scmp.ne.s32.totalorder %s51, %s52
      %p61 = scmp.eq.s32.totalorder %s20, 0
      %p62 = por %p60, %p61
      %p63 = scmp.ne.s32.totalorder %s51, %s52
      %p64 = scmp.eq.s32.totalorder %s21, 1
      %p65 = por %p63, %p64
      %p67 = scmp.ne.s32.totalorder %s52, %s66
      %p68 = scmp.eq.s32.totalorder %s21, 0
      %p69 = por %p67, %p68
      %s71 = sadd.s32 %s70, 1
      %p74 = scmp.eq.s32.totalorder %s15, 1
      %p75 = scmp.ne.s32.totalorder %s70, %s72
      %p76 = scmp.eq.s32.totalorder %s15, 0
      %p77 = por %p75, %p76
      %p78 = scmp.ne.s32.totalorder %s70, %s72
      %p79 = scmp.eq.s32.totalorder %s20, 1
      %p80 = por %p78, %p79
      %p81 = scmp.ne.s32.totalorder %s72, %s73
      %p82 = scmp.eq.s32.totalorder %s20, 0
      %p83 = por %p81, %p82
      %p84 = scmp.ne.s32.totalorder %s72, %s73
      %p85 = scmp.eq.s32.totalorder %s21, 1
      %p86 = por %p84, %p85
      %p88 = scmp.ne.s32.totalorder %s73, %s87
      %p89 = scmp.eq.s32.totalorder %s21, 0
      %p90 = por %p88, %p89
      %s92 = sadd.s32 %s91, 1
      %p95 = scmp.eq.s32.totalorder %s15, 1
      %p96 = scmp.ne.s32.totalorder %s91, %s93
      %p97 = scmp.eq.s32.totalorder %s15, 0
      %p98 = por %p96, %p97
      %p99 = scmp.ne.s32.totalorder %s91, %s93
      %p100 = scmp.eq.s32.totalorder %s20, 1
      %p101 = por %p99, %p100
      %p102 = scmp.ne.s32.totalorder %s93, %s94
      %p103 = scmp.eq.s32.totalorder %s20, 0
      %p104 = por %p102, %p103
      %p105 = scmp.ne.s32.totalorder %s93, %s94
      %p106 = scmp.eq.s32.totalorder %s21, 1
      %p107 = por %p105, %p106
      %p109 = scmp.ne.s32.totalorder %s94, %s108
      %p110 = scmp.eq.s32.totalorder %s21, 0
      %p111 = por %p109, %p110
      %s113 = sadd.s32 %s112, 1
      %p116 = scmp.eq.s32.totalorder %s15, 1
      %p117 = scmp.ne.s32.totalorder %s112, %s114
      %p118 = scmp.eq.s32.totalorder %s15, 0
      %p119 = por %p117, %p118
      %p120 = scmp.ne.s32.totalorder %s112, %s114
      %p121 = scmp.eq.s32.totalorder %s20, 1
      %p122 = por %p120, %p121
      %p123 = scmp.ne.s32.totalorder %s114, %s115
      %p124 = scmp.eq.s32.totalorder %s20, 0
      %p125 = por %p123, %p124
      %p126 = scmp.ne.s32.totalorder %s114, %s115
      %p127 = scmp.eq.s32.totalorder %s21, 1
      %p128 = por %p126, %p127
      %p130 = scmp.ne.s32.totalorder %s115, %s129
      %p131 = scmp.eq.s32.totalorder %s21, 0
      %p132 = por %p130, %p131
      %s134 = sadd.s32 %s133, 1
      %p137 = scmp.eq.s32.totalorder %s15, 1
      %p138 = scmp.ne.s32.totalorder %s133, %s135
      %p139 = scmp.eq.s32.totalorder %s15, 0
      %p140 = por %p138, %p139
      %p141 = scmp.ne.s32.totalorder %s133, %s135
      %p142 = scmp.eq.s32.totalorder %s20, 1
      %p143 = por %p141, %p142
      %p144 = scmp.ne.s32.totalorder %s135, %s136
      %p145 = scmp.eq.s32.totalorder %s20, 0
      %p146 = por %p144, %p145
      %p147 = scmp.ne.s32.totalorder %s135, %s136
      %p148 = scmp.eq.s32.totalorder %s21, 1
      %p149 = por %p147, %p148
      %p151 = scmp.ne.s32.totalorder %s136, %s150
      %p152 = scmp.eq.s32.totalorder %s21, 0
      %p153 = por %p151, %p152
      %s154 = ssub.s32 %s15, %s22
      %p155 = scmp.eq.s32.totalorder %s154, 0
      %s157 = sadd.s32 %s156, 1
      %s158 = scalar_select %p155, %s156, %s157
      %p161 = pneg %p155
      %p162 = scmp.eq.s32.totalorder %s15, 1
      %p163 = por %p161, %p162
      %p164 = scmp.ne.s32.totalorder %s156, %s159
      %p165 = scmp.eq.s32.totalorder %s15, 0
      %p166 = por %p164, %p165
      %p167 = scmp.ne.s32.totalorder %s156, %s159
      %p168 = scmp.eq.s32.totalorder %s20, 1
      %p169 = por %p167, %p168
      %p170 = scmp.ne.s32.totalorder %s159, %s160
      %p171 = scmp.eq.s32.totalorder %s20, 0
      %p172 = por %p170, %p171
      %p173 = scmp.ne.s32.totalorder %s159, %s160
      %p174 = scmp.eq.s32.totalorder %s21, 1
      %p175 = por %p173, %p174
      %p177 = scmp.ne.s32.totalorder %s160, %s176
      %p178 = scmp.eq.s32.totalorder %s21, 0
      %p179 = por %p177, %p178
      %p180 = scmp.le.s32.totalorder 1, %s15
      %p181 = scmp.lt.s32.totalorder %s15, 3
      %p182 = pnand %p180, %p181
      %p183 = pneg %p182
      // Predicated region
      $region9: #{tpu_custom_call.1} parent=5 // pred_check
        _
      $region10: #{tpu_custom_call.1} parent=5 // pred_check_branch
        %185 = sbr.rel (%p182) target = $region12
      $region11: #{tpu_custom_call.1} parent=5 // pred_region
        %s186 = ssub.s32 %s15, 1
        // Predicated region
        $region13: #{tpu_custom_call.1} parent=11 // pred_check
          %p187 = pneg %p62
        $region14: #{tpu_custom_call.1} parent=11 // pred_check_branch
          %189 = sbr.rel (%p187) target = $region16
        $region15: #{tpu_custom_call.1} parent=11 // pred_region
          _
        $region16: #{tpu_custom_call.1} parent=11 // pred_fallthru
          _
        // Predicated region
        $region17: #{tpu_custom_call.1} parent=11 // pred_check
          %p190 = pneg %p83
        $region18: #{tpu_custom_call.1} parent=11 // pred_check_branch
          %192 = sbr.rel (%p190) target = $region20
        $region19: #{tpu_custom_call.1} parent=11 // pred_region
          _
        $region20: #{tpu_custom_call.1} parent=11 // pred_fallthru
          _
        // Predicated region
        $region21: #{tpu_custom_call.1} parent=11 // pred_check
          %p193 = pneg %p104
        $region22: #{tpu_custom_call.1} parent=11 // pred_check_branch
          %195 = sbr.rel (%p193) target = $region24
        $region23: #{tpu_custom_call.1} parent=11 // pred_region
          _
        $region24: #{tpu_custom_call.1} parent=11 // pred_fallthru
          _
        // Predicated region
        $region25: #{tpu_custom_call.1} parent=11 // pred_check
          %p196 = pneg %p125
        $region26: #{tpu_custom_call.1} parent=11 // pred_check_branch
          %198 = sbr.rel (%p196) target = $region28
        $region27: #{tpu_custom_call.1} parent=11 // pred_region
          _
        $region28: #{tpu_custom_call.1} parent=11 // pred_fallthru
          _
        // Predicated region
        $region29: #{tpu_custom_call.1} parent=11 // pred_check
          %p199 = pneg %p146
        $region30: #{tpu_custom_call.1} parent=11 // pred_check_branch
          %201 = sbr.rel (%p199) target = $region32
        $region31: #{tpu_custom_call.1} parent=11 // pred_region
          _
        $region32: #{tpu_custom_call.1} parent=11 // pred_fallthru
          _
      $region12: #{tpu_custom_call.1} parent=5 // pred_fallthru
        _
      %p202 = scmp.lt.s32.totalorder %s15, 2
      // Predicated region
      $region33: #{tpu_custom_call.1} parent=5 // pred_check
        %p203 = pneg %p202
      $region34: #{tpu_custom_call.1} parent=5 // pred_check_branch
        %205 = sbr.rel (%p203) target = $region36
      $region35: #{tpu_custom_call.1} parent=5 // pred_region
        // Predicated region
        $region37: #{tpu_custom_call.1} parent=35 // pred_check
          %p206 = pneg %p35
        $region38: #{tpu_custom_call.1} parent=35 // pred_check_branch
          %208 = sbr.rel (%p206) target = $region40
        $region39: #{tpu_custom_call.1} parent=35 // pred_region
          %s209 = smul.u32 16, %s15
          %p210 = scmp.lt.s32.totalorder %s209, 31
          %s211 = scalar_select %p210, %s209, 31
          %s212 = smul.addr %s211, 2
          %s213 = smul.addr %s212, 4
          %s214 = scalar_lea.vmem %s0, %s213
          %s215 = smul.u32 16, %s15
        $region40: #{tpu_custom_call.1} parent=35 // pred_fallthru
          _
      $region36: #{tpu_custom_call.1} parent=5 // pred_fallthru
        _
      %p216 = scmp.le.s32.totalorder 1, %s15
      %p217 = scmp.lt.s32.totalorder %s15, 3
      %p218 = pnand %p216, %p217
      %p219 = pneg %p218
      // Predicated region
      $region41: #{tpu_custom_call.1} parent=5 // pred_check
        _
      $region42: #{tpu_custom_call.1} parent=5 // pred_check_branch
        %221 = sbr.rel (%p218) target = $region44
      $region43: #{tpu_custom_call.1} parent=5 // pred_region
        %s222 = ssub.s32 %s15, 1
        %s223 = smul.u32 16, %s20
        %p224 = scmp.lt.s32.totalorder %s223, 31
        %s225 = scalar_select %p224, %s223, 31
        %s226 = smul.addr %s225, 2
        %s227 = smul.addr %s226, 4
        %s228 = scalar_lea.vmem %s0, %s227
        %p229 = pneg %p41
        %p230 = pneg %p38
        %p231 = pneg %p62
        %p232 = pneg %p59
        %p233 = pneg %p83
        %p234 = pneg %p80
        %p235 = pneg %p104
        %p236 = pneg %p101
        %p237 = pneg %p125
        %p238 = pneg %p122
        %p239 = pneg %p146
        %p240 = pneg %p143
        %p241 = pneg %p172
        %p242 = pneg %p169
        %s243 = sand.u32 %s159, 1
        %s244 = scalar_lea.sflag [#allocation3], %s243
        %s245 = sand.u32 %s159, 1
        %s246 = smul.addr %s245, 8
        %s247 = scalar_lea.vmem [#allocation2], %s246
        %s248 = smul.u32 16, %s20
        %p249 = scmp.lt.s32.totalorder %s248, 31
        %s250 = scalar_select %p249, %s248, 31
        %s251 = smul.addr %s250, 2
        %s252 = smul.addr %s251, 4
        %s253 = scalar_lea.vmem %s0, %s252
        %s254 = smul.u32 16, %s20
        %v256 = vld [vmem:[%s253] sm:$0xff]
        %v257 = vld [vmem:[%s253 + $0x8] sm:$0xff]
        %v258 = vld [vmem:[%s253 + $0x10] sm:$0xff]
        %v259 = vld [vmem:[%s253 + $0x18] sm:$0xff]
        %v260 = vld [vmem:[%s253 + $0x20] sm:$0xff]
        %v261 = vld [vmem:[%s253 + $0x28] sm:$0xff]
        %v262 = vld [vmem:[%s253 + $0x30] sm:$0xff]
        %v263 = vld [vmem:[%s253 + $0x38] sm:$0xff]
        %v264 = vld [vmem:[%s253 + $0x40] sm:$0xff]
        %v265 = vld [vmem:[%s253 + $0x48] sm:$0xff]
        %v266 = vld [vmem:[%s253 + $0x50] sm:$0xff]
        %v267 = vld [vmem:[%s253 + $0x58] sm:$0xff]
        %v268 = vld [vmem:[%s253 + $0x60] sm:$0xff]
        %v269 = vld [vmem:[%s253 + $0x68] sm:$0xff]
        %v270 = vld [vmem:[%s253 + $0x70] sm:$0xff]
        %v271 = vld [vmem:[%s253 + $0x78] sm:$0xff]
        %v272 = vld [vmem:[%s1] sm:$0xf]
        %v273 = vld [vmem:[%s1 + $0x4] sm:$0xf]
        %v274 = vld [vmem:[%s1 + $0x8] sm:$0xf]
        %v275 = vld [vmem:[%s1 + $0xc] sm:$0xf]
        %v276 = vld [vmem:[%s1 + $0x10] sm:$0xf]
        %v277 = vld [vmem:[%s1 + $0x14] sm:$0xf]
        %v278 = vld [vmem:[%s1 + $0x18] sm:$0xf]
        %v279 = vld [vmem:[%s1 + $0x1c] sm:$0xf]
        %v280 = vld [vmem:[%s1 + $0x20] sm:$0xf]
        %v281 = vld [vmem:[%s1 + $0x24] sm:$0xf]
        %v282 = vld [vmem:[%s1 + $0x28] sm:$0xf]
        %v283 = vld [vmem:[%s1 + $0x2c] sm:$0xf]
        %v284 = vld [vmem:[%s1 + $0x30] sm:$0xf]
        %v285 = vld [vmem:[%s1 + $0x34] sm:$0xf]
        %v286 = vld [vmem:[%s1 + $0x38] sm:$0xf]
        %v287 = vld [vmem:[%s1 + $0x3c] sm:$0xf]
        %v288 = vld [vmem:[%s1 + $0x40] sm:$0xf]
        %v289 = vld [vmem:[%s1 + $0x44] sm:$0xf]
        %v290 = vld [vmem:[%s1 + $0x48] sm:$0xf]
        %v291 = vld [vmem:[%s1 + $0x4c] sm:$0xf]
        %v308 = vunpack.c.l.b16 %v256
        %v309 = vunpack.c.h.b16 %v256
        %v310 = vunpack.c.l.b16 %v257
        %v311 = vunpack.c.h.b16 %v257
        %v312 = vunpack.c.l.b16 %v258
        %v313 = vunpack.c.h.b16 %v258
        %v314 = vunpack.c.l.b16 %v259
        %v315 = vunpack.c.h.b16 %v259
        %v316 = vunpack.c.l.b16 %v260
        %v317 = vunpack.c.h.b16 %v260
        %v318 = vunpack.c.l.b16 %v261
        %v319 = vunpack.c.h.b16 %v261
        %v320 = vunpack.c.l.b16 %v262
        %v321 = vunpack.c.h.b16 %v262
        %v322 = vunpack.c.l.b16 %v263
        %v323 = vunpack.c.h.b16 %v263
        %v324 = vunpack.c.l.b16 %v264
        %v325 = vunpack.c.h.b16 %v264
        %v326 = vunpack.c.l.b16 %v265
        %v327 = vunpack.c.h.b16 %v265
        %v328 = vunpack.c.l.b16 %v266
        %v329 = vunpack.c.h.b16 %v266
        %v330 = vunpack.c.l.b16 %v267
        %v331 = vunpack.c.h.b16 %v267
        %v332 = vunpack.c.l.b16 %v268
        %v333 = vunpack.c.h.b16 %v268
        %v334 = vunpack.c.l.b16 %v269
        %v335 = vunpack.c.h.b16 %v269
        %v336 = vunpack.c.l.b16 %v270
        %v337 = vunpack.c.h.b16 %v270
        %v338 = vunpack.c.l.b16 %v271
        %v339 = vunpack.c.h.b16 %v271
        %v340 = vpack.c.b16 %v310, %v308
        %v341 = vpack.c.b16 %v311, %v309
        %v342 = vpack.c.b16 %v314, %v312
        %v343 = vpack.c.b16 %v315, %v313
        %v344 = vpack.c.b16 %v318, %v316
        %v345 = vpack.c.b16 %v319, %v317
        %v346 = vpack.c.b16 %v322, %v320
        %v347 = vpack.c.b16 %v323, %v321
        %v348 = vpack.c.b16 %v326, %v324
        %v349 = vpack.c.b16 %v327, %v325
        %v350 = vpack.c.b16 %v330, %v328
        %v351 = vpack.c.b16 %v331, %v329
        %v352 = vpack.c.b16 %v334, %v332
        %v353 = vpack.c.b16 %v335, %v333
        %v354 = vpack.c.b16 %v338, %v336
        %v355 = vpack.c.b16 %v339, %v337
        %v384 = vunpack.c.l.b16 %v272
        %v385 = vunpack.c.l.b16 %v273
        %v386 = vunpack.c.l.b16 %v274
        %v387 = vunpack.c.l.b16 %v275
        %v388 = vunpack.c.l.b16 %v276
        %v389 = vunpack.c.l.b16 %v277
        %v390 = vunpack.c.l.b16 %v278
        %v391 = vunpack.c.l.b16 %v279
        %v392 = vunpack.c.l.b16 %v280
        %v393 = vunpack.c.l.b16 %v281
        %v394 = vunpack.c.l.b16 %v282
        %v395 = vunpack.c.l.b16 %v283
        %v396 = vunpack.c.l.b16 %v284
        %v397 = vunpack.c.l.b16 %v285
        %v398 = vunpack.c.l.b16 %v286
        %v399 = vunpack.c.l.b16 %v287
        %v400 = vunpack.c.l.b16 %v288
        %v401 = vunpack.c.l.b16 %v289
        %v402 = vunpack.c.l.b16 %v290
        %v403 = vunpack.c.l.b16 %v291
        %v404 = vpack.c.b16 %v385, %v384
        %v405 = vpack.c.b16 %v387, %v386
        %v406 = vpack.c.b16 %v389, %v388
        %v407 = vpack.c.b16 %v391, %v390
        %v408 = vpack.c.b16 %v393, %v392
        %v409 = vpack.c.b16 %v395, %v394
        %v410 = vpack.c.b16 %v397, %v396
        %v411 = vpack.c.b16 %v399, %v398
        %v412 = vpack.c.b16 %v401, %v400
        %v413 = vpack.c.b16 %v403, %v402
        %vm424 = vcmask 261120
        %v426 = vsel %vm424, %v341, 0
        %v429 = vsel %vm424, %v343, 0
        %v432 = vsel %vm424, %v345, 0
        %v435 = vsel %vm424, %v347, 0
        %v438 = vsel %vm424, %v349, 0
        %v441 = vsel %vm424, %v351, 0
        %v444 = vsel %vm424, %v353, 0
        %v447 = vsel %vm424, %v355, 0
        %449 = vmatprep.subr.bf16.mxu0 0
        %450 = vmatpush1.bf16.msra.mxu0 %v404
        %451 = vmatprep.subr.bf16.mxu0 0
        %452 = vmatpush1.bf16.msra.mxu0 %v405
        %453 = vmatprep.subr.bf16.mxu0 0
        %454 = vmatpush1.bf16.msra.mxu0 %v406
        %455 = vmatprep.subr.bf16.mxu0 0
        %456 = vmatpush1.bf16.msra.mxu0 %v407
        %457 = vmatprep.subr.bf16.mxu0 0
        %458 = vmatpush1.bf16.msra.mxu0 %v408
        %459 = vmatprep.subr.bf16.mxu0 0
        %460 = vmatpush1.bf16.msra.mxu0 %v409
        %461 = vmatprep.subr.bf16.mxu0 0
        %462 = vmatpush1.bf16.msra.mxu0 %v410
        %463 = vmatprep.subr.bf16.mxu0 0
        %464 = vmatpush1.bf16.msra.mxu0 %v411
        %465 = vmatprep.subr.bf16.mxu0 0
        %466 = vmatpush1.bf16.msra.mxu0 %v412
        %467 = vmatprep.subr.bf16.mxu0 0
        %468 = vmatpush1.bf16.msra.mxu0 %v413
        %469 = vmatprep.subr.bf16.mxu0 0
        %470 = vmatpush1.bf16.msra.mxu0 0
        %471 = vmatprep.subr.bf16.mxu0 0
        %472 = vmatpush1.bf16.msra.mxu0 0
        %473 = vmatprep.subr.bf16.mxu0 0
        %474 = vmatpush1.bf16.msra.mxu0 0
        %475 = vmatprep.subr.bf16.mxu0 0
        %476 = vmatpush1.bf16.msra.mxu0 0
        %477 = vmatprep.subr.bf16.mxu0 0
        %478 = vmatpush1.bf16.msra.mxu0 0
        %479 = vmatprep.subr.bf16.mxu0 0
        %480 = vmatpush1.bf16.msra.mxu0 0
        %481 = vmatprep.mubr.bf16.mxu0 %v426
        %482 = vmatmul.mubr.bf16.gmra.mrb[0].mxu0 %v340
        %v483 = vpop.f32.mrb[0].mxu0
        %v484 = vadd.f32 0.0, %v483
        %v485 = vpop.f32.mrb[0].mxu0
        %v486 = vpop.f32.mrb[0].mxu0
        %v487 = vadd.f32 0.0, %v486
        %v488 = vpop.f32.mrb[0].mxu0
        %489 = vmatprep.mubr.bf16.mxu0 %v429
        %490 = vmatmul.mubr.bf16.gmra.mrb[0].mxu0 %v342
        %v491 = vpop.f32.mrb[0].mxu0
        %v492 = vadd.f32 0.0, %v491
        %v493 = vpop.f32.mrb[0].mxu0
        %v494 = vpop.f32.mrb[0].mxu0
        %v495 = vadd.f32 0.0, %v494
        %v496 = vpop.f32.mrb[0].mxu0
        %497 = vmatprep.mubr.bf16.mxu0 %v432
        %498 = vmatmul.mubr.bf16.gmra.mrb[0].mxu0 %v344
        %v499 = vpop.f32.mrb[0].mxu0
        %v500 = vadd.f32 0.0, %v499
        %v501 = vpop.f32.mrb[0].mxu0
        %v502 = vpop.f32.mrb[0].mxu0
        %v503 = vadd.f32 0.0, %v502
        %v504 = vpop.f32.mrb[0].mxu0
        %505 = vmatprep.mubr.bf16.mxu0 %v435
        %506 = vmatmul.mubr.bf16.gmra.mrb[0].mxu0 %v346
        %v507 = vpop.f32.mrb[0].mxu0
        %v508 = vadd.f32 0.0, %v507
        %v509 = vpop.f32.mrb[0].mxu0
        %v510 = vpop.f32.mrb[0].mxu0
        %v511 = vadd.f32 0.0, %v510
        %v512 = vpop.f32.mrb[0].mxu0
        %513 = vmatprep.mubr.bf16.mxu0 %v438
        %514 = vmatmul.mubr.bf16.gmra.mrb[0].mxu0 %v348
        %v515 = vpop.f32.mrb[0].mxu0
        %v516 = vadd.f32 0.0, %v515
        %v517 = vpop.f32.mrb[0].mxu0
        %v518 = vpop.f32.mrb[0].mxu0
        %v519 = vadd.f32 0.0, %v518
        %v520 = vpop.f32.mrb[0].mxu0
        %521 = vmatprep.mubr.bf16.mxu0 %v441
        %522 = vmatmul.mubr.bf16.gmra.mrb[0].mxu0 %v350
        %v523 = vpop.f32.mrb[0].mxu0
        %v524 = vadd.f32 0.0, %v523
        %v525 = vpop.f32.mrb[0].mxu0
        %v526 = vpop.f32.mrb[0].mxu0
        %v527 = vadd.f32 0.0, %v526
        %v528 = vpop.f32.mrb[0].mxu0
        %529 = vmatprep.mubr.bf16.mxu0 %v444
        %530 = vmatmul.mubr.bf16.gmra.mrb[0].mxu0 %v352
        %v531 = vpop.f32.mrb[0].mxu0
        %v532 = vadd.f32 0.0, %v531
        %v533 = vpop.f32.mrb[0].mxu0
        %v534 = vpop.f32.mrb[0].mxu0
        %v535 = vadd.f32 0.0, %v534
        %v536 = vpop.f32.mrb[0].mxu0
        %537 = vmatprep.mubr.bf16.mxu0 %v447
        %538 = vmatmul.mubr.bf16.gmra.mrb[0].mxu0 %v354
        %v539 = vpop.f32.mrb[0].mxu0
        %v540 = vadd.f32 0.0, %v539
        %v541 = vpop.f32.mrb[0].mxu0
        %v542 = vpop.f32.mrb[0].mxu0
        %v543 = vadd.f32 0.0, %v542
        %v544 = vpop.f32.mrb[0].mxu0
        %545 = vdwg.mxu0
        %v546 = vlaneseq
        %v547 = vshrl.u32 %v546, 7
        %v548 = vadd.s32 %v547, 8
        %v549 = vld [vmem:[%s3] sm:$0x1]
        %v550 = vlaneseq
        %v551 = vshrl.u32 %v550, 7
        %v552 = vsub.s32 0, %v551
        %v553 = vrot.slane %v549, %v552
        %vm554 = vcmp.lt.s32.totalorder %v547, %v553
        %vm555 = vcmp.lt.s32.totalorder %v548, %v553
        %v556 = vsel %vm554, 1, 0
        %v557 = vsel %vm555, 1, 0
        %vm558 = vcmp.eq.s32.totalorder %v556, 1
        %vm559 = vcmp.eq.s32.totalorder %v557, 1
        %v560 = vsel %vm558, %v484, -inf
        %v561 = vsel %vm559, %v487, -inf
        %v562 = vsel %vm558, %v492, -inf
        %v563 = vsel %vm559, %v495, -inf
        %v564 = vsel %vm558, %v500, -inf
        %v565 = vsel %vm559, %v503, -inf
        %v566 = vsel %vm558, %v508, -inf
        %v567 = vsel %vm559, %v511, -inf
        %v568 = vsel %vm558, %v516, -inf
        %v569 = vsel %vm559, %v519, -inf
        %v570 = vsel %vm558, %v524, -inf
        %v571 = vsel %vm559, %v527, -inf
        %v572 = vsel %vm558, %v532, -inf
        %v573 = vsel %vm559, %v535, -inf
        %v574 = vsel %vm558, %v540, -inf
        %v575 = vsel %vm559, %v543, -inf
        %v576 = vmax.f32 %v560, %v561
        %v577 = vrot.slane %v576, 4
        %v578 = vmax.f32 %v576, %v577
        %v579 = vrot.slane %v578, 2
        %v580 = vmax.f32 %v578, %v579
        %v581 = vrot.slane %v580, 1
        %v582 = vmax.f32 %v580, %v581
        %v583 = vmax.f32 %v562, %v563
        %v584 = vrot.slane %v583, 4
        %v585 = vmax.f32 %v583, %v584
        %v586 = vrot.slane %v585, 2
        %v587 = vmax.f32 %v585, %v586
        %v588 = vrot.slane %v587, 1
        %v589 = vmax.f32 %v587, %v588
        %v590 = vmax.f32 %v564, %v565
        %v591 = vrot.slane %v590, 4
        %v592 = vmax.f32 %v590, %v591
        %v593 = vrot.slane %v592, 2
        %v594 = vmax.f32 %v592, %v593
        %v595 = vrot.slane %v594, 1
        %v596 = vmax.f32 %v594, %v595
        %v597 = vmax.f32 %v566, %v567
        %v598 = vrot.slane %v597, 4
        %v599 = vmax.f32 %v597, %v598
        %v600 = vrot.slane %v599, 2
        %v601 = vmax.f32 %v599, %v600
        %v602 = vrot.slane %v601, 1
        %v603 = vmax.f32 %v601, %v602
        %v604 = vmax.f32 %v568, %v569
        %v605 = vrot.slane %v604, 4
        %v606 = vmax.f32 %v604, %v605
        %v607 = vrot.slane %v606, 2
        %v608 = vmax.f32 %v606, %v607
        %v609 = vrot.slane %v608, 1
        %v610 = vmax.f32 %v608, %v609
        %v611 = vmax.f32 %v570, %v571
        %v612 = vrot.slane %v611, 4
        %v613 = vmax.f32 %v611, %v612
        %v614 = vrot.slane %v613, 2
        %v615 = vmax.f32 %v613, %v614
        %v616 = vrot.slane %v615, 1
        %v617 = vmax.f32 %v615, %v616
        %v618 = vmax.f32 %v572, %v573
        %v619 = vrot.slane %v618, 4
        %v620 = vmax.f32 %v618, %v619
        %v621 = vrot.slane %v620, 2
        %v622 = vmax.f32 %v620, %v621
        %v623 = vrot.slane %v622, 1
        %v624 = vmax.f32 %v622, %v623
        %v625 = vmax.f32 %v574, %v575
        %v626 = vrot.slane %v625, 4
        %v627 = vmax.f32 %v625, %v626
        %v628 = vrot.slane %v627, 2
        %v629 = vmax.f32 %v627, %v628
        %v630 = vrot.slane %v629, 1
        %v631 = vmax.f32 %v629, %v630
        %v632 = vld [vmem:[%s2] sm:$0x1]
        %v634 = vlaneseq
        %v635 = vshrl.u32 %v634, 7
        %v636 = vsub.s32 0, %v635
        %v637 = vrot.slane %v632, %v636
        %v639 = vadd.f32 %v582, %v637
        %v640 = vadd.f32 %v589, %v637
        %v641 = vadd.f32 %v596, %v637
        %v642 = vadd.f32 %v603, %v637
        %v643 = vadd.f32 %v610, %v637
        %v644 = vadd.f32 %v617, %v637
        %v645 = vadd.f32 %v624, %v637
        %v646 = vadd.f32 %v631, %v637
        %v647 = vmax.f32 %v639, 0.0
        %v648 = vmax.f32 %v640, 0.0
        %v649 = vmax.f32 %v641, 0.0
        %v650 = vmax.f32 %v642, 0.0
        %v651 = vmax.f32 %v643, 0.0
        %v652 = vmax.f32 %v644, 0.0
        %v653 = vmax.f32 %v645, 0.0
        %v654 = vmax.f32 %v646, 0.0
        %v655 = vld [vmem:[%s4] sm:$0xff]
        %v656 = vld [vmem:[%s4 + $0x8] sm:$0xff]
        %v657 = vld [vmem:[%s4 + $0x10] sm:$0xff]
        %v658 = vld [vmem:[%s4 + $0x18] sm:$0xff]
        %v659 = vld [vmem:[%s4 + $0x20] sm:$0xff]
        %v660 = vld [vmem:[%s4 + $0x28] sm:$0xff]
        %v661 = vld [vmem:[%s4 + $0x30] sm:$0xff]
        %v662 = vld [vmem:[%s4 + $0x38] sm:$0xff]
        %v663 = vld [vmem:[%s4 + $0x40] sm:$0xff]
        %v664 = vld [vmem:[%s4 + $0x48] sm:$0xff]
        %v665 = vld [vmem:[%s4 + $0x50] sm:$0xff]
        %v666 = vld [vmem:[%s4 + $0x58] sm:$0xff]
        %v667 = vld [vmem:[%s4 + $0x60] sm:$0xff]
        %v668 = vld [vmem:[%s4 + $0x68] sm:$0xff]
        %v669 = vld [vmem:[%s4 + $0x70] sm:$0xff]
        %v670 = vld [vmem:[%s4 + $0x78] sm:$0xff]
        %v671 = vld [vmem:[%s5] sm:$0x1]
        %v673 = vlaneseq
        %v674 = vshrl.u32 %v673, 7
        %v675 = vsub.s32 0, %v674
        %v676 = vrot.slane %v671, %v675
        %v686 = vrot.slane %v648, 7
        %vm687 = vcmask 1041409
        %v688 = vsel %vm687, %v686, %v647
        %v689 = vrot.slane %v649, 6
        %vm690 = vcmask 1042434
        %v691 = vsel %vm690, %v689, %v688
        %v692 = vrot.slane %v650, 5
        %vm693 = vcmask 1043459
        %v694 = vsel %vm693, %v692, %v691
        %v695 = vrot.slane %v651, 4
        %vm696 = vcmask 1044484
        %v697 = vsel %vm696, %v695, %v694
        %v698 = vrot.slane %v652, 3
        %vm699 = vcmask 1045509
        %v700 = vsel %vm699, %v698, %v697
        %v701 = vrot.slane %v653, 2
        %vm702 = vcmask 1046534
        %v703 = vsel %vm702, %v701, %v700
        %v704 = vrot.slane %v654, 1
        %vm705 = vcmask 1047559
        %v706 = vsel %vm705, %v704, %v703
        %708 = vmatprep.subr.mxu0 0.0
        %709 = vmatpush1.msra.mxu0 %v655
        %710 = vmatprep.subr.mxu0 0.0
        %711 = vmatpush1.msra.mxu0 %v656
        %712 = vmatprep.subr.mxu0 0.0
        %713 = vmatpush1.msra.mxu0 %v657
        %714 = vmatprep.subr.mxu0 0.0
        %715 = vmatpush1.msra.mxu0 %v658
        %716 = vmatprep.subr.mxu0 0.0
        %717 = vmatpush1.msra.mxu0 %v659
        %718 = vmatprep.subr.mxu0 0.0
        %719 = vmatpush1.msra.mxu0 %v660
        %720 = vmatprep.subr.mxu0 0.0
        %721 = vmatpush1.msra.mxu0 %v661
        %722 = vmatprep.subr.mxu0 0.0
        %723 = vmatpush1.msra.mxu0 %v662
        %724 = vmatprep.subr.mxu0 0.0
        %725 = vmatpush1.msra.mxu0 %v663
        %726 = vmatprep.subr.mxu0 0.0
        %727 = vmatpush1.msra.mxu0 %v664
        %728 = vmatprep.subr.mxu0 0.0
        %729 = vmatpush1.msra.mxu0 %v665
        %730 = vmatprep.subr.mxu0 0.0
        %731 = vmatpush1.msra.mxu0 %v666
        %732 = vmatprep.subr.mxu0 0.0
        %733 = vmatpush1.msra.mxu0 %v667
        %734 = vmatprep.subr.mxu0 0.0
        %735 = vmatpush1.msra.mxu0 %v668
        %736 = vmatprep.subr.mxu0 0.0
        %737 = vmatpush1.msra.mxu0 %v669
        %738 = vmatprep.subr.mxu0 0.0
        %739 = vmatpush1.msra.mxu0 %v670
        %740 = vmatprep.subr.mxu0 0.0
        %741 = vmatpush1.msra.mxu0 0.0
        %742 = vmatprep.subr.mxu0 0.0
        %743 = vmatpush1.msra.mxu0 0.0
        %744 = vmatprep.subr.mxu0 0.0
        %745 = vmatpush1.msra.mxu0 0.0
        %746 = vmatprep.subr.mxu0 0.0
        %747 = vmatpush1.msra.mxu0 0.0
        %748 = vmatprep.subr.mxu0 0.0
        %749 = vmatpush1.msra.mxu0 0.0
        %750 = vmatprep.subr.mxu0 0.0
        %751 = vmatpush1.msra.mxu0 0.0
        %752 = vmatprep.subr.mxu0 0.0
        %753 = vmatpush1.msra.mxu0 0.0
        %754 = vmatprep.subr.mxu0 0.0
        %755 = vmatpush1.msra.mxu0 0.0
        %756 = vmatprep.subr.mxu0 0.0
        %757 = vmatpush1.msra.mxu0 0.0
        %758 = vmatprep.subr.mxu0 0.0
        %759 = vmatpush1.msra.mxu0 0.0
        %760 = vmatprep.subr.mxu0 0.0
        %761 = vmatpush1.msra.mxu0 0.0
        %762 = vmatprep.subr.mxu0 0.0
        %763 = vmatpush1.msra.mxu0 0.0
        %764 = vmatprep.subr.mxu0 0.0
        %765 = vmatpush1.msra.mxu0 0.0
        %766 = vmatprep.subr.mxu0 0.0
        %767 = vmatpush1.msra.mxu0 0.0
        %768 = vmatprep.subr.mxu0 0.0
        %769 = vmatpush1.msra.mxu0 0.0
        %770 = vmatprep.subr.mxu0 0.0
        %771 = vmatpush1.msra.mxu0 0.0
        %772 = vmatprep.mubr.f32.mxu0 0.0
        %773 = vmatmul.mubr.f32.gmra.mrb[0].mxu0 %v706
        %v774 = vpop.f32.mrb[0].mxu0
        %v775 = vadd.f32 %v676, %v774
        %v776 = vpop.f32.mrb[0].mxu0
        %777 = vdwg.mxu0
        %778 = vst [vmem:[%s247] sm:$0xff] %v775
        %s779 = sand.u32 %s159, 1
        %s780 = scalar_lea.sflag [#allocation3], %s779
        %s781 = sand.u32 %s159, 1
        %s782 = smul.addr %s781, 8
        %s783 = scalar_lea.vmem [#allocation2], %s782
        // Predicated region
        $region45: #{tpu_custom_call.1} parent=43 // pred_check
          %p784 = pneg %p169
        $region46: #{tpu_custom_call.1} parent=43 // pred_check_branch
          %786 = sbr.rel (%p784) target = $region48
        $region47: #{tpu_custom_call.1} parent=43 // pred_region
          %s788 = ssub.s32 128, 128
          %789 = vsyncadd %s780, %s788
          %s790 = smul.addr %s20, 128
          %s791 = scalar_lea.hbm %s6, %s790
          %s793 = sshll.u32 %s783, 4
          %s794 = int_to_ptr.vmem [resolvable:$true] %s793
          %796 = dma.vmem_to_hbm [thread:$0]  %s794, 128, %s791, %s780
        $region48: #{tpu_custom_call.1} parent=43 // pred_fallthru
          _
      $region44: #{tpu_custom_call.1} parent=5 // pred_fallthru
        _
      %p797 = scmp.le.s32.totalorder 2, %s15
      // Predicated region
      $region49: #{tpu_custom_call.1} parent=5 // pred_check
        %p798 = pneg %p797
      $region50: #{tpu_custom_call.1} parent=5 // pred_check_branch
        %800 = sbr.rel (%p798) target = $region52
      $region51: #{tpu_custom_call.1} parent=5 // pred_region
        %s801 = ssub.s32 %s15, 2
        // Predicated region
        $region53: #{tpu_custom_call.1} parent=51 // pred_check
          %p802 = pneg %p175
        $region54: #{tpu_custom_call.1} parent=51 // pred_check_branch
          %804 = sbr.rel (%p802) target = $region56
        $region55: #{tpu_custom_call.1} parent=51 // pred_region
          %s805 = sand.u32 %s160, 1
          %s806 = scalar_lea.sflag [#allocation3], %s805
          %s807 = sand.u32 %s160, 1
          %s808 = smul.addr %s807, 8
          %s809 = scalar_lea.vmem [#allocation2], %s808
          %810 = dma.done %s806, 128
        $region56: #{tpu_custom_call.1} parent=51 // pred_fallthru
          _
      $region52: #{tpu_custom_call.1} parent=5 // pred_fallthru
        _
    $region6: #{tpu_custom_call.1} parent=1 // loop_footer
      %s19 = sadd.s32 1, %s15
    $region7: #{tpu_custom_call.1} parent=1 // loop_footer_branch
      %14 = sbr.rel target = $region3
    $region8: #{tpu_custom_call.1} parent=1 // loop_exit
      _
    %811 = vsyncpa [#allocation3], 1
    %s812 = scalar_lea.sflag [#allocation3], 1
    %813 = vsyncpa %s812, 1

</llo_original>
